<compile_context>
chip_gen: v6e
topology: v6e:2x2x1
jax: 0.10.0
libtpu: 0.0.40
codegen_flags: <defaults>
</compile_context>

<pallas_src>
import jax
import jax.numpy as jnp
import numpy as np
from jax.experimental import pallas as pl
from jax.experimental.pallas import tpu as pltpu

POOL = 400                                 # fixed window size from the module
_PADDED_POOL_LANES = 512                   # 400 rounds up to 4 lane-tiles of 128
_X_BLOCK_BUDGET_BYTES = 8 * 1024 * 1024    # per x block (double-buffered by Pallas)


def _ceil_div(a, b):
    return -(-a // b)


def _vmem_limit_bytes():
    """Generation-aware VMEM cap: ~48 MiB on v7x (64 MiB/TC), ~96 MiB on v5e/v6e."""
    cap = 64 * 1024 * 1024
    try:
        info = pltpu.get_tpu_info()
        cap = int(getattr(info, "vmem_capacity_bytes", cap))
    except Exception:
        pass
    return max(32 * 1024 * 1024, min((cap * 3) // 4, 96 * 1024 * 1024))


def _choose_s_tile(S, B, C, itemsize, vmem_limit):
    """Pick (s_tile, grid_s): pooled windows per grid step and #steps along S."""
    if S <= 128:
        # One full-dim block along S (full-dim blocks always satisfy (8,128)).
        return S, 1

    def fits(s):
        x_block = C * s * _PADDED_POOL_LANES * itemsize        # one x block
        interm = 3 * s * _PADDED_POOL_LANES * 4                # acc + cast slice + temp (f32)
        out_block = 8 * s * 4                                  # O padded to 8 sublanes
        need = 2 * x_block + interm + 2 * out_block + (4 << 20)
        return x_block <= _X_BLOCK_BUDGET_BYTES and need <= vmem_limit

    aligned_divisors = [d for d in range(128, S + 1, 128) if S % d == 0]
    if aligned_divisors:
        cands = aligned_divisors
    else:
        # No 128-aligned divisor: lane-aligned tile + masked tail block
        # (grid_s = ceil(S / s_tile); Pallas masks the ragged writes).
        cands = list(range(128, min(S, 8192) + 1, 128))

    best = 128
    for d in cands:
        # Keep at least 2 grid steps total so v7x's two TensorCores both work.
        if d > best and fits(d) and B * _ceil_div(S, d) >= 2:
            best = d
    return best, _ceil_div(S, best)


def _waveout_kernel(x_ref, w1_ref, b1_ref, w2_ref, b2_ref, o_ref):
    # x_ref : (1, C, s_tile, POOL) VMEM block, streamed in the input dtype.
    # w1_ref: (C, C) SMEM   b1_ref: (C,) SMEM
    # w2_ref: (O, C) SMEM (already scaled by 1/POOL)   b2_ref: (O,) SMEM
    # o_ref : (1, O, s_tile)
    C = x_ref.shape[1]
    O = o_ref.shape[1]

    # First k=1 conv + sin + window-sum, one hidden channel at a time: the only
    # live full-size f32 intermediates are `acc` and one cast slice
    # (~2 * s_tile * 512 * 4 B), independent of C.
    pooled = []                                                   # C x (1, s_tile) f32
    for oc in range(C):
        acc = None
        for ic in range(C):
            # Per-channel slice + upcast fused into the MAC; never materialise
            # a full-block f32 copy of x.
            xc = x_ref[0, ic:ic + 1, :, :].astype(jnp.float32)    # (1, s_tile, POOL)
            term = w1_ref[oc, ic] * xc
            acc = term if acc is None else acc + term
        # TODO(synk): if the bundle shows VALU-bound on v6e/v7x with bf16
        # streaming, do this MAC in bf16 (bf16 VALU) and/or drop the 400->512
        # lane padding; kept f32 so the same kernel is exact on v5e.
        h = jnp.sin(acc + b1_ref[oc])                             # (1, s_tile, POOL)
        pooled.append(jnp.sum(h, axis=-1))                        # (1, s_tile); /400 folded into w2

    # Second k=1 conv over pooled windows.
    rows = []
    for oo in range(O):
        y = w2_ref[oo, 0] * pooled[0]
        for ic in range(1, C):
            y = y + w2_ref[oo, ic] * pooled[ic]
        rows.append(y + b2_ref[oo])                               # (1, s_tile)
    o_ref[0] = jnp.concatenate(rows, axis=0).astype(o_ref.dtype)  # (O, s_tile), lane-dense


def waveout_block(x_nct, w1, b1, w2, b2):
    """x_nct: (B, C, T) (f32 or bf16). w1: (C, C), b1: (C,), w2: (O, C), b2: (O,).

    Returns (B, O, T // 400) float32, matching the PyTorch module (NCT in/out).
    """
    B, C, T = x_nct.shape
    if T % POOL != 0:
        raise ValueError("T must be divisible by 400")
    S = T // POOL
    O = w2.shape[0]

    # Free row-major split of the time axis -> pooling windows get their own dim.
    x4 = x_nct.reshape(B, C, S, POOL)

    w1f = w1.astype(jnp.float32)
    b1f = b1.astype(jnp.float32)
    w2f = w2.astype(jnp.float32) * (1.0 / POOL)   # fold the mean's 1/400 into W2
    b2f = b2.astype(jnp.float32)

    vmem_limit = _vmem_limit_bytes()
    s_tile, grid_s = _choose_s_tile(S, B, C, jnp.dtype(x4.dtype).itemsize, vmem_limit)
    grid = (B, grid_s)

    out = pl.pallas_call(
        _waveout_kernel,
        out_shape=jax.ShapeDtypeStruct((B, O, S), jnp.float32),
        grid=grid,
        in_specs=[
            pl.BlockSpec((1, C, s_tile, POOL), lambda b, s: (b, 0, s, 0)),    # x
            pl.BlockSpec(memory_space=pltpu.MemorySpace.SMEM),                # W1
            pl.BlockSpec(memory_space=pltpu.MemorySpace.SMEM),                # b1
            pl.BlockSpec(memory_space=pltpu.MemorySpace.SMEM),                # W2 (pre-scaled)
            pl.BlockSpec(memory_space=pltpu.MemorySpace.SMEM),                # b2
        ],
        out_specs=pl.BlockSpec((1, O, s_tile), lambda b, s: (b, 0, s)),
        compiler_params=pltpu.CompilerParams(
            dimension_semantics=("parallel", "parallel"),
            vmem_limit_bytes=vmem_limit,
        ),
    )(x4, w1f, b1f, w2f, b2f)
    return out


def _reference(x_nct, w1, b1, w2, b2):
    # Pure-JAX reference mirroring the PyTorch forward.
    B, C, T = x_nct.shape
    S = T // POOL
    h = jnp.einsum("oc,bct->bot", w1, x_nct, precision="highest") + b1[None, :, None]
    h = jnp.sin(h)
    p = h.reshape(B, C, S, POOL).mean(axis=-1)
    y = jnp.einsum("oc,bcs->bos", w2, p, precision="highest") + b2[None, :, None]
    return y


if __name__ == "__main__":
    B, C, O = 2, 4, 2
    key = jax.random.PRNGKey(0)
    kx, k1w, k1b, k2w, k2b, kx2, kx3 = jax.random.split(key, 7)

    # first conv: weight uniform(-sqrt(6/C), sqrt(6/C)) per module __init__;
    # bias / second conv use the default Conv1d init range (+-1/sqrt(fan_in)).
    bound1 = float(np.sqrt(6.0 / C))
    bb = float(1.0 / np.sqrt(C))
    w1 = jax.random.uniform(k1w, (C, C), minval=-bound1, maxval=bound1, dtype=jnp.float32)
    b1 = jax.random.uniform(k1b, (C,), minval=-bb, maxval=bb, dtype=jnp.float32)
    w2 = jax.random.uniform(k2w, (O, C), minval=-bb, maxval=bb, dtype=jnp.float32)
    b2 = jax.random.uniform(k2b, (O,), minval=-bb, maxval=bb, dtype=jnp.float32)

    # 1) Small shape consistent with the module (T multiple of 400): S = 2.
    T = 2 * POOL
    x = jax.random.normal(kx, (B, C, T), dtype=jnp.float32)
    y = jax.block_until_ready(waveout_block(x, w1, b1, w2, b2))
    assert y.shape == (B, O, T // POOL), y.shape
    np.testing.assert_allclose(np.asarray(y), np.asarray(_reference(x, w1, b1, w2, b2)),
                               rtol=1e-5, atol=2e-5)

    # 2) Tiled path (S = 256, 128-aligned tiles), f32 and bf16-streamed inputs.
    T2 = 256 * POOL
    x2 = jax.random.normal(kx2, (B, C, T2), dtype=jnp.float32)
    y2_ref = _reference(x2, w1, b1, w2, b2)
    y2 = jax.block_until_ready(waveout_block(x2, w1, b1, w2, b2))
    np.testing.assert_allclose(np.asarray(y2), np.asarray(y2_ref), rtol=1e-5, atol=2e-5)
    y2_bf16 = jax.block_until_ready(waveout_block(x2.astype(jnp.bfloat16), w1, b1, w2, b2))
    np.testing.assert_allclose(np.asarray(y2_bf16), np.asarray(y2_ref), rtol=2e-2, atol=2e-2)

    # 3) Ragged S (= 136, not a multiple of 128): masked-tail tiling path.
    T3 = 136 * POOL
    x3 = jax.random.normal(kx3, (1, C, T3), dtype=jnp.float32)
    y3 = jax.block_until_ready(waveout_block(x3, w1, b1, w2, b2))
    np.testing.assert_allclose(np.asarray(y3), np.asarray(_reference(x3, w1, b1, w2, b2)),
                               rtol=1e-5, atol=2e-5)

    print("KERNEL_OK")
</pallas_src>

<mosaic_0001>
module attributes {stable_mosaic.version = 11 : i64} {
  func.func @_waveout_kernel(%arg0: i32, %arg1: i32, %arg2: memref<1x4x2x400xf32, #tpu.memory_space<vmem>>, %arg3: memref<4x4xf32, #tpu.memory_space<smem>>, %arg4: memref<4xf32, #tpu.memory_space<smem>>, %arg5: memref<2x4xf32, #tpu.memory_space<smem>>, %arg6: memref<2xf32, #tpu.memory_space<smem>>, %arg7: memref<1x2x2xf32, #tpu.memory_space<vmem>>) attributes {dimension_semantics = [#tpu.dimension_semantics<parallel>, #tpu.dimension_semantics<parallel>], iteration_bounds = array<i64: 2, 1>, scalar_prefetch = 0 : i64, scratch_operands = 0 : i64, tpu.core_type = #tpu.core_type<tc>, window_params = [{transform_indices = @transform_0, window_bounds = array<i64: 1, 4, 2, 400>}, {transform_indices = @transform_1, window_bounds = array<i64: 4, 4>}, {transform_indices = @transform_2, window_bounds = array<i64: 4>}, {transform_indices = @transform_3, window_bounds = array<i64: 2, 4>}, {transform_indices = @transform_4, window_bounds = array<i64: 2>}, {transform_indices = @transform_5, window_bounds = array<i64: 1, 2, 2>}]} {
    %c0 = arith.constant 0 : index
    %c0_0 = arith.constant 0 : index
    %c0_1 = arith.constant 0 : index
    %c0_2 = arith.constant 0 : index
    %0 = vector.load %arg2[%c0, %c0_0, %c0_1, %c0_2] : memref<1x4x2x400xf32, #tpu.memory_space<vmem>>, vector<1x1x2x400xf32>
    %1 = vector.shape_cast %0 : vector<1x1x2x400xf32> to vector<1x2x400xf32>
    %c0_3 = arith.constant 0 : index
    %c0_4 = arith.constant 0 : index
    %2 = memref.load %arg3[%c0_3, %c0_4] : memref<4x4xf32, #tpu.memory_space<smem>>
    %3 = vector.broadcast %2 : f32 to vector<1x2x400xf32>
    %4 = arith.mulf %3, %1 : vector<1x2x400xf32>
    %c0_5 = arith.constant 0 : index
    %c1 = arith.constant 1 : index
    %c0_6 = arith.constant 0 : index
    %c0_7 = arith.constant 0 : index
    %5 = vector.load %arg2[%c0_5, %c1, %c0_6, %c0_7] : memref<1x4x2x400xf32, #tpu.memory_space<vmem>>, vector<1x1x2x400xf32>
    %6 = vector.shape_cast %5 : vector<1x1x2x400xf32> to vector<1x2x400xf32>
    %c0_8 = arith.constant 0 : index
    %c1_9 = arith.constant 1 : index
    %7 = memref.load %arg3[%c0_8, %c1_9] : memref<4x4xf32, #tpu.memory_space<smem>>
    %8 = vector.broadcast %7 : f32 to vector<1x2x400xf32>
    %9 = arith.mulf %8, %6 : vector<1x2x400xf32>
    %10 = arith.addf %4, %9 : vector<1x2x400xf32>
    %c0_10 = arith.constant 0 : index
    %c2 = arith.constant 2 : index
    %c0_11 = arith.constant 0 : index
    %c0_12 = arith.constant 0 : index
    %11 = vector.load %arg2[%c0_10, %c2, %c0_11, %c0_12] : memref<1x4x2x400xf32, #tpu.memory_space<vmem>>, vector<1x1x2x400xf32>
    %12 = vector.shape_cast %11 : vector<1x1x2x400xf32> to vector<1x2x400xf32>
    %c0_13 = arith.constant 0 : index
    %c2_14 = arith.constant 2 : index
    %13 = memref.load %arg3[%c0_13, %c2_14] : memref<4x4xf32, #tpu.memory_space<smem>>
    %14 = vector.broadcast %13 : f32 to vector<1x2x400xf32>
    %15 = arith.mulf %14, %12 : vector<1x2x400xf32>
    %16 = arith.addf %10, %15 : vector<1x2x400xf32>
    %c0_15 = arith.constant 0 : index
    %c3 = arith.constant 3 : index
    %c0_16 = arith.constant 0 : index
    %c0_17 = arith.constant 0 : index
    %17 = vector.load %arg2[%c0_15, %c3, %c0_16, %c0_17] : memref<1x4x2x400xf32, #tpu.memory_space<vmem>>, vector<1x1x2x400xf32>
    %18 = vector.shape_cast %17 : vector<1x1x2x400xf32> to vector<1x2x400xf32>
    %c0_18 = arith.constant 0 : index
    %c3_19 = arith.constant 3 : index
    %19 = memref.load %arg3[%c0_18, %c3_19] : memref<4x4xf32, #tpu.memory_space<smem>>
    %20 = vector.broadcast %19 : f32 to vector<1x2x400xf32>
    %21 = arith.mulf %20, %18 : vector<1x2x400xf32>
    %22 = arith.addf %16, %21 : vector<1x2x400xf32>
    %c0_20 = arith.constant 0 : index
    %23 = memref.load %arg4[%c0_20] : memref<4xf32, #tpu.memory_space<smem>>
    %24 = vector.broadcast %23 : f32 to vector<1x2x400xf32>
    %25 = arith.addf %22, %24 : vector<1x2x400xf32>
    %26 = math.sin %25 : vector<1x2x400xf32>
    %cst = arith.constant dense<0.000000e+00> : vector<1x2xf32>
    %27 = vector.multi_reduction <add>, %26, %cst [2] : vector<1x2x400xf32> to vector<1x2xf32>
    %c0_21 = arith.constant 0 : index
    %c0_22 = arith.constant 0 : index
    %c0_23 = arith.constant 0 : index
    %c0_24 = arith.constant 0 : index
    %28 = vector.load %arg2[%c0_21, %c0_22, %c0_23, %c0_24] : memref<1x4x2x400xf32, #tpu.memory_space<vmem>>, vector<1x1x2x400xf32>
    %29 = vector.shape_cast %28 : vector<1x1x2x400xf32> to vector<1x2x400xf32>
    %c1_25 = arith.constant 1 : index
    %c0_26 = arith.constant 0 : index
    %30 = memref.load %arg3[%c1_25, %c0_26] : memref<4x4xf32, #tpu.memory_space<smem>>
    %31 = vector.broadcast %30 : f32 to vector<1x2x400xf32>
    %32 = arith.mulf %31, %29 : vector<1x2x400xf32>
    %c0_27 = arith.constant 0 : index
    %c1_28 = arith.constant 1 : index
    %c0_29 = arith.constant 0 : index
    %c0_30 = arith.constant 0 : index
    %33 = vector.load %arg2[%c0_27, %c1_28, %c0_29, %c0_30] : memref<1x4x2x400xf32, #tpu.memory_space<vmem>>, vector<1x1x2x400xf32>
    %34 = vector.shape_cast %33 : vector<1x1x2x400xf32> to vector<1x2x400xf32>
    %c1_31 = arith.constant 1 : index
    %c1_32 = arith.constant 1 : index
    %35 = memref.load %arg3[%c1_31, %c1_32] : memref<4x4xf32, #tpu.memory_space<smem>>
    %36 = vector.broadcast %35 : f32 to vector<1x2x400xf32>
    %37 = arith.mulf %36, %34 : vector<1x2x400xf32>
    %38 = arith.addf %32, %37 : vector<1x2x400xf32>
    %c0_33 = arith.constant 0 : index
    %c2_34 = arith.constant 2 : index
    %c0_35 = arith.constant 0 : index
    %c0_36 = arith.constant 0 : index
    %39 = vector.load %arg2[%c0_33, %c2_34, %c0_35, %c0_36] : memref<1x4x2x400xf32, #tpu.memory_space<vmem>>, vector<1x1x2x400xf32>
    %40 = vector.shape_cast %39 : vector<1x1x2x400xf32> to vector<1x2x400xf32>
    %c1_37 = arith.constant 1 : index
    %c2_38 = arith.constant 2 : index
    %41 = memref.load %arg3[%c1_37, %c2_38] : memref<4x4xf32, #tpu.memory_space<smem>>
    %42 = vector.broadcast %41 : f32 to vector<1x2x400xf32>
    %43 = arith.mulf %42, %40 : vector<1x2x400xf32>
    %44 = arith.addf %38, %43 : vector<1x2x400xf32>
    %c0_39 = arith.constant 0 : index
    %c3_40 = arith.constant 3 : index
    %c0_41 = arith.constant 0 : index
    %c0_42 = arith.constant 0 : index
    %45 = vector.load %arg2[%c0_39, %c3_40, %c0_41, %c0_42] : memref<1x4x2x400xf32, #tpu.memory_space<vmem>>, vector<1x1x2x400xf32>
    %46 = vector.shape_cast %45 : vector<1x1x2x400xf32> to vector<1x2x400xf32>
    %c1_43 = arith.constant 1 : index
    %c3_44 = arith.constant 3 : index
    %47 = memref.load %arg3[%c1_43, %c3_44] : memref<4x4xf32, #tpu.memory_space<smem>>
    %48 = vector.broadcast %47 : f32 to vector<1x2x400xf32>
    %49 = arith.mulf %48, %46 : vector<1x2x400xf32>
    %50 = arith.addf %44, %49 : vector<1x2x400xf32>
    %c1_45 = arith.constant 1 : index
    %51 = memref.load %arg4[%c1_45] : memref<4xf32, #tpu.memory_space<smem>>
    %52 = vector.broadcast %51 : f32 to vector<1x2x400xf32>
    %53 = arith.addf %50, %52 : vector<1x2x400xf32>
    %54 = math.sin %53 : vector<1x2x400xf32>
    %cst_46 = arith.constant dense<0.000000e+00> : vector<1x2xf32>
    %55 = vector.multi_reduction <add>, %54, %cst_46 [2] : vector<1x2x400xf32> to vector<1x2xf32>
    %c0_47 = arith.constant 0 : index
    %c0_48 = arith.constant 0 : index
    %c0_49 = arith.constant 0 : index
    %c0_50 = arith.constant 0 : index
    %56 = vector.load %arg2[%c0_47, %c0_48, %c0_49, %c0_50] : memref<1x4x2x400xf32, #tpu.memory_space<vmem>>, vector<1x1x2x400xf32>
    %57 = vector.shape_cast %56 : vector<1x1x2x400xf32> to vector<1x2x400xf32>
    %c2_51 = arith.constant 2 : index
    %c0_52 = arith.constant 0 : index
    %58 = memref.load %arg3[%c2_51, %c0_52] : memref<4x4xf32, #tpu.memory_space<smem>>
    %59 = vector.broadcast %58 : f32 to vector<1x2x400xf32>
    %60 = arith.mulf %59, %57 : vector<1x2x400xf32>
    %c0_53 = arith.constant 0 : index
    %c1_54 = arith.constant 1 : index
    %c0_55 = arith.constant 0 : index
    %c0_56 = arith.constant 0 : index
    %61 = vector.load %arg2[%c0_53, %c1_54, %c0_55, %c0_56] : memref<1x4x2x400xf32, #tpu.memory_space<vmem>>, vector<1x1x2x400xf32>
    %62 = vector.shape_cast %61 : vector<1x1x2x400xf32> to vector<1x2x400xf32>
    %c2_57 = arith.constant 2 : index
    %c1_58 = arith.constant 1 : index
    %63 = memref.load %arg3[%c2_57, %c1_58] : memref<4x4xf32, #tpu.memory_space<smem>>
    %64 = vector.broadcast %63 : f32 to vector<1x2x400xf32>
    %65 = arith.mulf %64, %62 : vector<1x2x400xf32>
    %66 = arith.addf %60, %65 : vector<1x2x400xf32>
    %c0_59 = arith.constant 0 : index
    %c2_60 = arith.constant 2 : index
    %c0_61 = arith.constant 0 : index
    %c0_62 = arith.constant 0 : index
    %67 = vector.load %arg2[%c0_59, %c2_60, %c0_61, %c0_62] : memref<1x4x2x400xf32, #tpu.memory_space<vmem>>, vector<1x1x2x400xf32>
    %68 = vector.shape_cast %67 : vector<1x1x2x400xf32> to vector<1x2x400xf32>
    %c2_63 = arith.constant 2 : index
    %c2_64 = arith.constant 2 : index
    %69 = memref.load %arg3[%c2_63, %c2_64] : memref<4x4xf32, #tpu.memory_space<smem>>
    %70 = vector.broadcast %69 : f32 to vector<1x2x400xf32>
    %71 = arith.mulf %70, %68 : vector<1x2x400xf32>
    %72 = arith.addf %66, %71 : vector<1x2x400xf32>
    %c0_65 = arith.constant 0 : index
    %c3_66 = arith.constant 3 : index
    %c0_67 = arith.constant 0 : index
    %c0_68 = arith.constant 0 : index
    %73 = vector.load %arg2[%c0_65, %c3_66, %c0_67, %c0_68] : memref<1x4x2x400xf32, #tpu.memory_space<vmem>>, vector<1x1x2x400xf32>
    %74 = vector.shape_cast %73 : vector<1x1x2x400xf32> to vector<1x2x400xf32>
    %c2_69 = arith.constant 2 : index
    %c3_70 = arith.constant 3 : index
    %75 = memref.load %arg3[%c2_69, %c3_70] : memref<4x4xf32, #tpu.memory_space<smem>>
    %76 = vector.broadcast %75 : f32 to vector<1x2x400xf32>
    %77 = arith.mulf %76, %74 : vector<1x2x400xf32>
    %78 = arith.addf %72, %77 : vector<1x2x400xf32>
    %c2_71 = arith.constant 2 : index
    %79 = memref.load %arg4[%c2_71] : memref<4xf32, #tpu.memory_space<smem>>
    %80 = vector.broadcast %79 : f32 to vector<1x2x400xf32>
    %81 = arith.addf %78, %80 : vector<1x2x400xf32>
    %82 = math.sin %81 : vector<1x2x400xf32>
    %cst_72 = arith.constant dense<0.000000e+00> : vector<1x2xf32>
    %83 = vector.multi_reduction <add>, %82, %cst_72 [2] : vector<1x2x400xf32> to vector<1x2xf32>
    %c0_73 = arith.constant 0 : index
    %c0_74 = arith.constant 0 : index
    %c0_75 = arith.constant 0 : index
    %c0_76 = arith.constant 0 : index
    %84 = vector.load %arg2[%c0_73, %c0_74, %c0_75, %c0_76] : memref<1x4x2x400xf32, #tpu.memory_space<vmem>>, vector<1x1x2x400xf32>
    %85 = vector.shape_cast %84 : vector<1x1x2x400xf32> to vector<1x2x400xf32>
    %c3_77 = arith.constant 3 : index
    %c0_78 = arith.constant 0 : index
    %86 = memref.load %arg3[%c3_77, %c0_78] : memref<4x4xf32, #tpu.memory_space<smem>>
    %87 = vector.broadcast %86 : f32 to vector<1x2x400xf32>
    %88 = arith.mulf %87, %85 : vector<1x2x400xf32>
    %c0_79 = arith.constant 0 : index
    %c1_80 = arith.constant 1 : index
    %c0_81 = arith.constant 0 : index
    %c0_82 = arith.constant 0 : index
    %89 = vector.load %arg2[%c0_79, %c1_80, %c0_81, %c0_82] : memref<1x4x2x400xf32, #tpu.memory_space<vmem>>, vector<1x1x2x400xf32>
    %90 = vector.shape_cast %89 : vector<1x1x2x400xf32> to vector<1x2x400xf32>
    %c3_83 = arith.constant 3 : index
    %c1_84 = arith.constant 1 : index
    %91 = memref.load %arg3[%c3_83, %c1_84] : memref<4x4xf32, #tpu.memory_space<smem>>
    %92 = vector.broadcast %91 : f32 to vector<1x2x400xf32>
    %93 = arith.mulf %92, %90 : vector<1x2x400xf32>
    %94 = arith.addf %88, %93 : vector<1x2x400xf32>
    %c0_85 = arith.constant 0 : index
    %c2_86 = arith.constant 2 : index
    %c0_87 = arith.constant 0 : index
    %c0_88 = arith.constant 0 : index
    %95 = vector.load %arg2[%c0_85, %c2_86, %c0_87, %c0_88] : memref<1x4x2x400xf32, #tpu.memory_space<vmem>>, vector<1x1x2x400xf32>
    %96 = vector.shape_cast %95 : vector<1x1x2x400xf32> to vector<1x2x400xf32>
    %c3_89 = arith.constant 3 : index
    %c2_90 = arith.constant 2 : index
    %97 = memref.load %arg3[%c3_89, %c2_90] : memref<4x4xf32, #tpu.memory_space<smem>>
    %98 = vector.broadcast %97 : f32 to vector<1x2x400xf32>
    %99 = arith.mulf %98, %96 : vector<1x2x400xf32>
    %100 = arith.addf %94, %99 : vector<1x2x400xf32>
    %c0_91 = arith.constant 0 : index
    %c3_92 = arith.constant 3 : index
    %c0_93 = arith.constant 0 : index
    %c0_94 = arith.constant 0 : index
    %101 = vector.load %arg2[%c0_91, %c3_92, %c0_93, %c0_94] : memref<1x4x2x400xf32, #tpu.memory_space<vmem>>, vector<1x1x2x400xf32>
    %102 = vector.shape_cast %101 : vector<1x1x2x400xf32> to vector<1x2x400xf32>
    %c3_95 = arith.constant 3 : index
    %c3_96 = arith.constant 3 : index
    %103 = memref.load %arg3[%c3_95, %c3_96] : memref<4x4xf32, #tpu.memory_space<smem>>
    %104 = vector.broadcast %103 : f32 to vector<1x2x400xf32>
    %105 = arith.mulf %104, %102 : vector<1x2x400xf32>
    %106 = arith.addf %100, %105 : vector<1x2x400xf32>
    %c3_97 = arith.constant 3 : index
    %107 = memref.load %arg4[%c3_97] : memref<4xf32, #tpu.memory_space<smem>>
    %108 = vector.broadcast %107 : f32 to vector<1x2x400xf32>
    %109 = arith.addf %106, %108 : vector<1x2x400xf32>
    %110 = math.sin %109 : vector<1x2x400xf32>
    %cst_98 = arith.constant dense<0.000000e+00> : vector<1x2xf32>
    %111 = vector.multi_reduction <add>, %110, %cst_98 [2] : vector<1x2x400xf32> to vector<1x2xf32>
    %c0_99 = arith.constant 0 : index
    %c0_100 = arith.constant 0 : index
    %112 = memref.load %arg5[%c0_99, %c0_100] : memref<2x4xf32, #tpu.memory_space<smem>>
    %113 = vector.broadcast %112 : f32 to vector<1x2xf32>
    %114 = arith.mulf %113, %27 : vector<1x2xf32>
    %c0_101 = arith.constant 0 : index
    %c1_102 = arith.constant 1 : index
    %115 = memref.load %arg5[%c0_101, %c1_102] : memref<2x4xf32, #tpu.memory_space<smem>>
    %116 = vector.broadcast %115 : f32 to vector<1x2xf32>
    %117 = arith.mulf %116, %55 : vector<1x2xf32>
    %118 = arith.addf %114, %117 : vector<1x2xf32>
    %c0_103 = arith.constant 0 : index
    %c2_104 = arith.constant 2 : index
    %119 = memref.load %arg5[%c0_103, %c2_104] : memref<2x4xf32, #tpu.memory_space<smem>>
    %120 = vector.broadcast %119 : f32 to vector<1x2xf32>
    %121 = arith.mulf %120, %83 : vector<1x2xf32>
    %122 = arith.addf %118, %121 : vector<1x2xf32>
    %c0_105 = arith.constant 0 : index
    %c3_106 = arith.constant 3 : index
    %123 = memref.load %arg5[%c0_105, %c3_106] : memref<2x4xf32, #tpu.memory_space<smem>>
    %124 = vector.broadcast %123 : f32 to vector<1x2xf32>
    %125 = arith.mulf %124, %111 : vector<1x2xf32>
    %126 = arith.addf %122, %125 : vector<1x2xf32>
    %c0_107 = arith.constant 0 : index
    %127 = memref.load %arg6[%c0_107] : memref<2xf32, #tpu.memory_space<smem>>
    %128 = vector.broadcast %127 : f32 to vector<1x2xf32>
    %129 = arith.addf %126, %128 : vector<1x2xf32>
    %c1_108 = arith.constant 1 : index
    %c0_109 = arith.constant 0 : index
    %130 = memref.load %arg5[%c1_108, %c0_109] : memref<2x4xf32, #tpu.memory_space<smem>>
    %131 = vector.broadcast %130 : f32 to vector<1x2xf32>
    %132 = arith.mulf %131, %27 : vector<1x2xf32>
    %c1_110 = arith.constant 1 : index
    %c1_111 = arith.constant 1 : index
    %133 = memref.load %arg5[%c1_110, %c1_111] : memref<2x4xf32, #tpu.memory_space<smem>>
    %134 = vector.broadcast %133 : f32 to vector<1x2xf32>
    %135 = arith.mulf %134, %55 : vector<1x2xf32>
    %136 = arith.addf %132, %135 : vector<1x2xf32>
    %c1_112 = arith.constant 1 : index
    %c2_113 = arith.constant 2 : index
    %137 = memref.load %arg5[%c1_112, %c2_113] : memref<2x4xf32, #tpu.memory_space<smem>>
    %138 = vector.broadcast %137 : f32 to vector<1x2xf32>
    %139 = arith.mulf %138, %83 : vector<1x2xf32>
    %140 = arith.addf %136, %139 : vector<1x2xf32>
    %c1_114 = arith.constant 1 : index
    %c3_115 = arith.constant 3 : index
    %141 = memref.load %arg5[%c1_114, %c3_115] : memref<2x4xf32, #tpu.memory_space<smem>>
    %142 = vector.broadcast %141 : f32 to vector<1x2xf32>
    %143 = arith.mulf %142, %111 : vector<1x2xf32>
    %144 = arith.addf %140, %143 : vector<1x2xf32>
    %c1_116 = arith.constant 1 : index
    %145 = memref.load %arg6[%c1_116] : memref<2xf32, #tpu.memory_space<smem>>
    %146 = vector.broadcast %145 : f32 to vector<1x2xf32>
    %147 = arith.addf %144, %146 : vector<1x2xf32>
    %148 = tpu.concatenate %129, %147 in 0 : vector<1x2xf32>, vector<1x2xf32> -> vector<2x2xf32>
    %c0_117 = arith.constant 0 : index
    %c0_118 = arith.constant 0 : index
    %c0_119 = arith.constant 0 : index
    %149 = vector.load %arg7[%c0_117, %c0_118, %c0_119] : memref<1x2x2xf32, #tpu.memory_space<vmem>>, vector<1x2x2xf32>
    %150 = vector.shape_cast %149 : vector<1x2x2xf32> to vector<2x2xf32>
    %151 = vector.shape_cast %148 : vector<2x2xf32> to vector<1x2x2xf32>
    tpu.vector_store %arg7[%c0_117, %c0_118, %c0_119], %151 {strides = array<i32>} : memref<1x2x2xf32, #tpu.memory_space<vmem>>, vector<1x2x2xf32>,
    return
  }
  func.func @transform_0(%arg0: i32, %arg1: i32) -> (i32, i32, i32, i32) {
    %c0_i32 = arith.constant 0 : i32
    %c0_i32_0 = arith.constant 0 : i32
    %c0_i32_1 = arith.constant 0 : i32
    return %arg0, %c0_i32, %arg1, %c0_i32_0 : i32, i32, i32, i32
  }
  func.func @transform_1(%arg0: i32, %arg1: i32) -> (i32, i32) {
    %c0_i32 = arith.constant 0 : i32
    %c0_i32_0 = arith.constant 0 : i32
    %c0_i32_1 = arith.constant 0 : i32
    return %c0_i32, %c0_i32_0 : i32, i32
  }
  func.func @transform_2(%arg0: i32, %arg1: i32) -> i32 {
    %c0_i32 = arith.constant 0 : i32
    %c0_i32_0 = arith.constant 0 : i32
    return %c0_i32 : i32
  }
  func.func @transform_3(%arg0: i32, %arg1: i32) -> (i32, i32) {
    %c0_i32 = arith.constant 0 : i32
    %c0_i32_0 = arith.constant 0 : i32
    %c0_i32_1 = arith.constant 0 : i32
    return %c0_i32, %c0_i32_0 : i32, i32
  }
  func.func @transform_4(%arg0: i32, %arg1: i32) -> i32 {
    %c0_i32 = arith.constant 0 : i32
    %c0_i32_0 = arith.constant 0 : i32
    return %c0_i32 : i32
  }
  func.func @transform_5(%arg0: i32, %arg1: i32) -> (i32, i32, i32) {
    %c0_i32 = arith.constant 0 : i32
    %c0_i32_0 = arith.constant 0 : i32
    return %arg0, %c0_i32, %arg1 : i32, i32, i32
  }
}

</mosaic_0001>

<llo_original>
// kernel: tpu_custom_call.1
$region0: #{tpu_custom_call.1}
  #allocation0 [shape = 'u32[]', space=smem, size = 0x4, offset = 0x4, fixed_abs, tag = 'smem constant byte address 0x4 - core index']
  #allocation1 [shape = 'u32[144,128]{1,0:T(1,128)}', space=vmem, size = 0x12000, scoped, tag = 'internal scratch']
  %s0 = inlined_call_operand.hbm [shape: f32[2,4,2,400], index: 0, kind: input, shape index: {}]
  %s1 = inlined_call_operand.hbm [shape: f32[4,4], index: 1, kind: input, shape index: {}]
  %s2 = inlined_call_operand.vmem [shape: f32[4], index: 2, kind: input, shape index: {}]
  %s3 = inlined_call_operand.vmem [shape: f32[2,4], index: 3, kind: input, shape index: {}]
  %s4 = inlined_call_operand.vmem [shape: f32[2], index: 4, kind: input, shape index: {}]
  %s5 = inlined_call_operand.hbm [shape: f32[2,2,2], index: 5, kind: output, shape index: {}]
  %s6 = sld [smem:[#allocation0]]
  $region73: #{tpu_custom_call.1} parent=0
    _
  %s8 = ssub.s32 1, %s6
  %s9 = scalar_select 0, %s8, %s6
  $region1: #{tpu_custom_call.1} parent=0
    #allocation2 [shape = 'u8[32768]{0}', space=vmem, size = 0x8000, scoped, tag = 'input window, operand 0']
    #allocation3 [shape = 's32[2]{0}', space=sflag, size = 0x8, scoped, tag = 'scoped memory for tpu_custom_call.1']
    #allocation4 [shape = 's32[2]{0}', space=sflag, size = 0x8, scoped, tag = 'scoped memory for tpu_custom_call.1']
    #allocation5 [shape = 's32[2]{0}', space=sflag, size = 0x8, scoped, tag = 'scoped memory for tpu_custom_call.1']
    #allocation6 [shape = 's32[2]{0}', space=sflag, size = 0x8, scoped, tag = 'scoped memory for tpu_custom_call.1']
    #allocation7 [shape = 'u8[2048]{0}', space=smem, size = 0x800, scoped, tag = 'input window, operand 1, single buffered']
    #allocation8 [shape = 'u8[512]{0}', space=smem, size = 0x200, scoped, tag = 'input window, operand 2, single buffered']
    #allocation9 [shape = 'u8[1024]{0}', space=smem, size = 0x400, scoped, tag = 'input window, operand 3, single buffered']
    #allocation10 [shape = 's32[1]{0}', space=sflag, size = 0x4, scoped, tag = 'scoped memory for tpu_custom_call.1']
    #allocation11 [shape = 'u8[512]{0}', space=smem, size = 0x200, scoped, tag = 'input window, operand 4, single buffered']
    #allocation12 [shape = 'u8[2048]{0}', space=vmem, size = 0x800, scoped, tag = 'output window, operand 0']
    %10 = vsyncpa [#allocation3], 0
    %s11 = scalar_lea.sflag [#allocation3], 1
    %12 = vsyncpa %s11, 0
    %13 = vsyncpa [#allocation5], 0
    %14 = vsyncpa [#allocation6], 0
    %15 = vsyncpa [#allocation10], 0
    %16 = vsyncpa [#allocation4], 0
    %s17 = scalar_lea.sflag [#allocation4], 1
    %18 = vsyncpa %s17, 0
    loop: start=0, step=1, limit=4
    $region2: #{tpu_custom_call.1} parent=1 // loop_pre_header
      _
    $region3: #{tpu_custom_call.1} parent=1 // loop_header
      %s20 = sphi 0, %s24
      %p21 = scmp.ge.s32.totalorder %s20, 4
      %s27 = sphi 0, %s39
      %s28 = sphi 0, %s35
      %s29 = sphi 0, %s27
      %s30 = sphi 0, %s28
      %s31 = sphi 0, %s29
      %s32 = sphi 0, %s30
      %s44 = sphi 0, %s46
      %s47 = sphi 0, %s44
      %s48 = sphi 0, %s47
      %s64 = sphi 0, %s48
      %s68 = sphi 0, %s68
      %s70 = sphi 0, %s68
      %s71 = sphi 0, %s70
      %s85 = sphi 0, %s71
      %s89 = sphi 0, %s89
      %s91 = sphi 0, %s89
      %s92 = sphi 0, %s91
      %s106 = sphi 0, %s92
      %s110 = sphi 0, %s110
      %s112 = sphi 0, %s110
      %s113 = sphi 0, %s112
      %s127 = sphi 0, %s113
      %s131 = sphi 0, %s131
      %s133 = sphi 0, %s131
      %s134 = sphi 0, %s133
      %s148 = sphi 0, %s134
      %s156 = sphi 0, %s158
      %s159 = sphi 0, %s156
      %s160 = sphi 0, %s159
      %s176 = sphi 0, %s160
    $region4: #{tpu_custom_call.1} parent=1 // loop_header_branch
      %23 = sbr.rel (%p21) target = $region8
    $region5: #{tpu_custom_call.1} parent=1 // loop_body
      %s25 = ssub.s32 %s20, 1
      %s26 = ssub.s32 %s20, 2
      %s33 = sadd.s32 1, %s28
      %p34 = scmp.ge.s32.totalorder %s33, 1
      %s35 = scalar_select %p34, 0, %s33
      %s36 = sadd.s32 1, %s27
      %s37 = scalar_select %p34, %s36, %s27
      %p38 = scmp.ge.s32.totalorder %s37, 2
      %s39 = scalar_select %p38, 0, %s37
      %s40 = ssub.s32 %s27, %s39
      %s41 = ssub.s32 %s28, %s35
      %s42 = sor.u32 %s40, %s41
      %p43 = scmp.eq.s32.totalorder %s42, 0
      %s45 = sadd.s32 %s44, 1
      %s46 = scalar_select %p43, %s44, %s45
      %p49 = pneg %p43
      %p50 = scmp.eq.s32.totalorder %s20, 1
      %p51 = por %p49, %p50
      %p52 = scmp.ne.s32.totalorder %s44, %s47
      %p53 = scmp.eq.s32.totalorder %s20, 0
      %p54 = por %p52, %p53
      %p55 = scmp.ne.s32.totalorder %s44, %s47
      %p56 = scmp.eq.s32.totalorder %s25, 1
      %p57 = por %p55, %p56
      %p58 = scmp.ne.s32.totalorder %s47, %s48
      %p59 = scmp.eq.s32.totalorder %s25, 0
      %p60 = por %p58, %p59
      %p61 = scmp.ne.s32.totalorder %s47, %s48
      %p62 = scmp.eq.s32.totalorder %s26, 1
      %p63 = por %p61, %p62
      %p65 = scmp.ne.s32.totalorder %s48, %s64
      %p66 = scmp.eq.s32.totalorder %s26, 0
      %p67 = por %p65, %p66
      %s69 = sadd.s32 %s68, 1
      %p72 = scmp.eq.s32.totalorder %s20, 1
      %p73 = scmp.ne.s32.totalorder %s68, %s70
      %p74 = scmp.eq.s32.totalorder %s20, 0
      %p75 = por %p73, %p74
      %p76 = scmp.ne.s32.totalorder %s68, %s70
      %p77 = scmp.eq.s32.totalorder %s25, 1
      %p78 = por %p76, %p77
      %p79 = scmp.ne.s32.totalorder %s70, %s71
      %p80 = scmp.eq.s32.totalorder %s25, 0
      %p81 = por %p79, %p80
      %p82 = scmp.ne.s32.totalorder %s70, %s71
      %p83 = scmp.eq.s32.totalorder %s26, 1
      %p84 = por %p82, %p83
      %p86 = scmp.ne.s32.totalorder %s71, %s85
      %p87 = scmp.eq.s32.totalorder %s26, 0
      %p88 = por %p86, %p87
      %s90 = sadd.s32 %s89, 1
      %p93 = scmp.eq.s32.totalorder %s20, 1
      %p94 = scmp.ne.s32.totalorder %s89, %s91
      %p95 = scmp.eq.s32.totalorder %s20, 0
      %p96 = por %p94, %p95
      %p97 = scmp.ne.s32.totalorder %s89, %s91
      %p98 = scmp.eq.s32.totalorder %s25, 1
      %p99 = por %p97, %p98
      %p100 = scmp.ne.s32.totalorder %s91, %s92
      %p101 = scmp.eq.s32.totalorder %s25, 0
      %p102 = por %p100, %p101
      %p103 = scmp.ne.s32.totalorder %s91, %s92
      %p104 = scmp.eq.s32.totalorder %s26, 1
      %p105 = por %p103, %p104
      %p107 = scmp.ne.s32.totalorder %s92, %s106
      %p108 = scmp.eq.s32.totalorder %s26, 0
      %p109 = por %p107, %p108
      %s111 = sadd.s32 %s110, 1
      %p114 = scmp.eq.s32.totalorder %s20, 1
      %p115 = scmp.ne.s32.totalorder %s110, %s112
      %p116 = scmp.eq.s32.totalorder %s20, 0
      %p117 = por %p115, %p116
      %p118 = scmp.ne.s32.totalorder %s110, %s112
      %p119 = scmp.eq.s32.totalorder %s25, 1
      %p120 = por %p118, %p119
      %p121 = scmp.ne.s32.totalorder %s112, %s113
      %p122 = scmp.eq.s32.totalorder %s25, 0
      %p123 = por %p121, %p122
      %p124 = scmp.ne.s32.totalorder %s112, %s113
      %p125 = scmp.eq.s32.totalorder %s26, 1
      %p126 = por %p124, %p125
      %p128 = scmp.ne.s32.totalorder %s113, %s127
      %p129 = scmp.eq.s32.totalorder %s26, 0
      %p130 = por %p128, %p129
      %s132 = sadd.s32 %s131, 1
      %p135 = scmp.eq.s32.totalorder %s20, 1
      %p136 = scmp.ne.s32.totalorder %s131, %s133
      %p137 = scmp.eq.s32.totalorder %s20, 0
      %p138 = por %p136, %p137
      %p139 = scmp.ne.s32.totalorder %s131, %s133
      %p140 = scmp.eq.s32.totalorder %s25, 1
      %p141 = por %p139, %p140
      %p142 = scmp.ne.s32.totalorder %s133, %s134
      %p143 = scmp.eq.s32.totalorder %s25, 0
      %p144 = por %p142, %p143
      %p145 = scmp.ne.s32.totalorder %s133, %s134
      %p146 = scmp.eq.s32.totalorder %s26, 1
      %p147 = por %p145, %p146
      %p149 = scmp.ne.s32.totalorder %s134, %s148
      %p150 = scmp.eq.s32.totalorder %s26, 0
      %p151 = por %p149, %p150
      %s152 = ssub.s32 %s27, %s39
      %s153 = ssub.s32 %s28, %s35
      %s154 = sor.u32 %s152, %s153
      %p155 = scmp.eq.s32.totalorder %s154, 0
      %s157 = sadd.s32 %s156, 1
      %s158 = scalar_select %p155, %s156, %s157
      %p161 = pneg %p155
      %p162 = scmp.eq.s32.totalorder %s20, 1
      %p163 = por %p161, %p162
      %p164 = scmp.ne.s32.totalorder %s156, %s159
      %p165 = scmp.eq.s32.totalorder %s20, 0
      %p166 = por %p164, %p165
      %p167 = scmp.ne.s32.totalorder %s156, %s159
      %p168 = scmp.eq.s32.totalorder %s25, 1
      %p169 = por %p167, %p168
      %p170 = scmp.ne.s32.totalorder %s159, %s160
      %p171 = scmp.eq.s32.totalorder %s25, 0
      %p172 = por %p170, %p171
      %p173 = scmp.ne.s32.totalorder %s159, %s160
      %p174 = scmp.eq.s32.totalorder %s26, 1
      %p175 = por %p173, %p174
      %p177 = scmp.ne.s32.totalorder %s160, %s176
      %p178 = scmp.eq.s32.totalorder %s26, 0
      %p179 = por %p177, %p178
      %p180 = scmp.le.s32.totalorder 1, %s20
      %p181 = scmp.lt.s32.totalorder %s20, 3
      %p182 = pnand %p180, %p181
      %p183 = pneg %p182
      // Predicated region
      $region9: #{tpu_custom_call.1} parent=5 // pred_check
        _
      $region10: #{tpu_custom_call.1} parent=5 // pred_check_branch
        %185 = sbr.rel (%p182) target = $region12
      $region11: #{tpu_custom_call.1} parent=5 // pred_region
        %s186 = ssub.s32 %s20, 1
        // Predicated region
        $region13: #{tpu_custom_call.1} parent=11 // pred_check
          %p187 = pneg %p81
        $region14: #{tpu_custom_call.1} parent=11 // pred_check_branch
          %189 = sbr.rel (%p187) target = $region16
        $region15: #{tpu_custom_call.1} parent=11 // pred_region
          %s191 = ssub.s32 64, 64
          %192 = vsyncadd [#allocation5], %s191
          %195 = dma.hbm_to_smem %s1, 64, [#allocation7], [#allocation5]
        $region16: #{tpu_custom_call.1} parent=11 // pred_fallthru
          _
        // Predicated region
        $region17: #{tpu_custom_call.1} parent=11 // pred_check
          %p196 = pneg %p102
        $region18: #{tpu_custom_call.1} parent=11 // pred_check_branch
          %198 = sbr.rel (%p196) target = $region20
        $region19: #{tpu_custom_call.1} parent=11 // pred_region
          %s200 = ssub.s32 16, 16
          %201 = vsyncadd [#allocation6], %s200
          %s203 = sshll.u32 %s2, 4
          %s204 = int_to_ptr.vmem [resolvable:$true] %s203
          %206 = dma.vmem_to_smem %s204, 16, [#allocation8], [#allocation6]
        $region20: #{tpu_custom_call.1} parent=11 // pred_fallthru
          _
        // Predicated region
        $region21: #{tpu_custom_call.1} parent=11 // pred_check
          %p207 = pneg %p123
        $region22: #{tpu_custom_call.1} parent=11 // pred_check_branch
          %209 = sbr.rel (%p207) target = $region24
        $region23: #{tpu_custom_call.1} parent=11 // pred_region
          %s211 = ssub.s32 32, 32
          %212 = vsyncadd [#allocation10], %s211
          %s214 = sshll.u32 %s3, 4
          %s215 = int_to_ptr.vmem [resolvable:$true] %s214
          %217 = dma.vmem_to_smem %s215, 32, [#allocation9], [#allocation10]
        $region24: #{tpu_custom_call.1} parent=11 // pred_fallthru
          _
        // Predicated region
        $region25: #{tpu_custom_call.1} parent=11 // pred_check
          %p218 = pneg %p144
        $region26: #{tpu_custom_call.1} parent=11 // pred_check_branch
          %220 = sbr.rel (%p218) target = $region28
        $region27: #{tpu_custom_call.1} parent=11 // pred_region
          %s222 = ssub.s32 16, 16
          %223 = vsyncadd [#allocation10], %s222
          %s225 = sshll.u32 %s4, 4
          %s226 = int_to_ptr.vmem [resolvable:$true] %s225
          %228 = dma.vmem_to_smem %s226, 16, [#allocation11], [#allocation10]
        $region28: #{tpu_custom_call.1} parent=11 // pred_fallthru
          _
      $region12: #{tpu_custom_call.1} parent=5 // pred_fallthru
        _
      %p229 = scmp.lt.s32.totalorder %s20, 2
      // Predicated region
      $region29: #{tpu_custom_call.1} parent=5 // pred_check
        %p230 = pneg %p229
      $region30: #{tpu_custom_call.1} parent=5 // pred_check_branch
        %232 = sbr.rel (%p230) target = $region32
      $region31: #{tpu_custom_call.1} parent=5 // pred_region
        // Predicated region
        $region33: #{tpu_custom_call.1} parent=31 // pred_check
          %p233 = pneg %p54
        $region34: #{tpu_custom_call.1} parent=31 // pred_check_branch
          %235 = sbr.rel (%p233) target = $region36
        $region35: #{tpu_custom_call.1} parent=31 // pred_region
          %s236 = sand.u32 %s44, 1
          %s237 = scalar_lea.sflag [#allocation3], %s236
          %s238 = sand.u32 %s44, 1
          %s239 = smul.addr %s238, 32
          %s240 = scalar_lea.vmem [#allocation2], %s239
          %s242 = ssub.s32 512, 512
          %243 = vsyncadd %s237, %s242
          %s244 = smul.addr %s28, 4
          %s245 = smul.addr %s27, 16
          %s246 = sadd.s32 %s244, %s245
          %s247 = smul.addr %s246, 32
          %s248 = scalar_lea.hbm %s0, %s247
          %s249 = sshll.u32 %s240, 4
          %s250 = int_to_ptr.vmem [resolvable:$true] %s249
          %255 = dma.hbm_to_vmem [thread:$0]  %s248, 512, %s250, %s237, 128, 128, 8
        $region36: #{tpu_custom_call.1} parent=31 // pred_fallthru
          _
      $region32: #{tpu_custom_call.1} parent=5 // pred_fallthru
        _
      %p256 = scmp.le.s32.totalorder 1, %s20
      %p257 = scmp.lt.s32.totalorder %s20, 3
      %p258 = pnand %p256, %p257
      %p259 = pneg %p258
      // Predicated region
      $region37: #{tpu_custom_call.1} parent=5 // pred_check
        _
      $region38: #{tpu_custom_call.1} parent=5 // pred_check_branch
        %261 = sbr.rel (%p258) target = $region40
      $region39: #{tpu_custom_call.1} parent=5 // pred_region
        %s262 = ssub.s32 %s20, 1
        %s263 = sand.u32 %s47, 1
        %s264 = scalar_lea.sflag [#allocation3], %s263
        %s265 = sand.u32 %s47, 1
        %s266 = smul.addr %s265, 32
        %s267 = scalar_lea.vmem [#allocation2], %s266
        // Predicated region
        $region41: #{tpu_custom_call.1} parent=39 // pred_check
          %p268 = pneg %p60
        $region42: #{tpu_custom_call.1} parent=39 // pred_check_branch
          %270 = sbr.rel (%p268) target = $region44
        $region43: #{tpu_custom_call.1} parent=39 // pred_region
          %271 = dma.done %s264, 512
        $region44: #{tpu_custom_call.1} parent=39 // pred_fallthru
          _
        // Predicated region
        $region45: #{tpu_custom_call.1} parent=39 // pred_check
          %p272 = pneg %p81
        $region46: #{tpu_custom_call.1} parent=39 // pred_check_branch
          %274 = sbr.rel (%p272) target = $region48
        $region47: #{tpu_custom_call.1} parent=39 // pred_region
          %275 = dma.done [#allocation5], 64
        $region48: #{tpu_custom_call.1} parent=39 // pred_fallthru
          _
        // Predicated region
        $region49: #{tpu_custom_call.1} parent=39 // pred_check
          %p276 = pneg %p102
        $region50: #{tpu_custom_call.1} parent=39 // pred_check_branch
          %278 = sbr.rel (%p276) target = $region52
        $region51: #{tpu_custom_call.1} parent=39 // pred_region
          %279 = dma.done [#allocation6], 16
        $region52: #{tpu_custom_call.1} parent=39 // pred_fallthru
          _
        // Predicated region
        $region53: #{tpu_custom_call.1} parent=39 // pred_check
          %p280 = pneg %p123
        $region54: #{tpu_custom_call.1} parent=39 // pred_check_branch
          %282 = sbr.rel (%p280) target = $region56
        $region55: #{tpu_custom_call.1} parent=39 // pred_region
          %283 = dma.done [#allocation10], 32
        $region56: #{tpu_custom_call.1} parent=39 // pred_fallthru
          _
        // Predicated region
        $region57: #{tpu_custom_call.1} parent=39 // pred_check
          %p284 = pneg %p144
        $region58: #{tpu_custom_call.1} parent=39 // pred_check_branch
          %286 = sbr.rel (%p284) target = $region60
        $region59: #{tpu_custom_call.1} parent=39 // pred_region
          %287 = dma.done [#allocation10], 16
        $region60: #{tpu_custom_call.1} parent=39 // pred_fallthru
          _
        %288 = sfence
        %s289 = sand.u32 %s47, 1
        %s290 = scalar_lea.sflag [#allocation3], %s289
        %s291 = sand.u32 %s47, 1
        %s292 = smul.addr %s291, 32
        %s293 = scalar_lea.vmem [#allocation2], %s292
        %p294 = pneg %p60
        %p295 = pneg %p57
        %p296 = pneg %p81
        %p297 = pneg %p78
        %p298 = pneg %p102
        %p299 = pneg %p99
        %p300 = pneg %p123
        %p301 = pneg %p120
        %p302 = pneg %p144
        %p303 = pneg %p141
        %p304 = pneg %p172
        %p305 = pneg %p169
        %s306 = sand.u32 %s159, 1
        %s307 = scalar_lea.sflag [#allocation4], %s306
        %s308 = sand.u32 %s159, 1
        %s309 = smul.addr %s308, 2
        %s310 = scalar_lea.vmem [#allocation12], %s309
        %v311 = vld [vmem:[%s267] sm:$0xff]
        %s312 = sld [smem:[#allocation7]]
        %v313 = vstv %s312
        %v314 = vmul.f32 %v313, %v311
        %s315 = scalar_lea.vmem %s267, 8 [#allocation2]
        %v316 = vld [vmem:[%s315] sm:$0xff]
        %s317 = sld [smem:[#allocation7 + $0x1]]
        %v318 = vstv %s317
        %v319 = vmul.f32 %v318, %v316
        %v320 = vadd.f32 %v314, %v319
        %s321 = scalar_lea.vmem %s267, 16 [#allocation2]
        %v322 = vld [vmem:[%s321] sm:$0xff]
        %s323 = sld [smem:[#allocation7 + $0x2]]
        %v324 = vstv %s323
        %v325 = vmul.f32 %v324, %v322
        %v326 = vadd.f32 %v320, %v325
        %s327 = scalar_lea.vmem %s267, 24 [#allocation2]
        %v328 = vld [vmem:[%s327] sm:$0xff]
        %s329 = sld [smem:[#allocation7 + $0x3]]
        %v330 = vstv %s329
        %v331 = vmul.f32 %v330, %v328
        %v332 = vadd.f32 %v326, %v331
        %s333 = sld [smem:[#allocation8]]
        %v334 = vstv %s333
        %v335 = vadd.f32 %v332, %v334
        %v336 = vand.u32 2147483647, %v335
        %vm337 = vcmp.le.f32.partialorder %v336, 0.7853982
        %vm338 = vcmp.lt.s32.totalorder %v335, 0
        %v339 = vand.u32 %v335, 2139095040
        %v340 = vshrl.u32 %v339, 23
        %v341 = vsub.s32 %v340, 127
        %v342 = vand.u32 2147483647, %v335
        %v343 = vand.u32 %v342, 8388607
        %v344 = vor.u32 %v343, 8388608
        %v345 = vsub.s32 0, %v344
        %v346 = vadd.s32 %v341, 1
        %vm347 = vcmp.gt.s32.totalorder %v346, 0
        %v348 = vsel %vm347, %v346, 0
        %v349 = vshrl.u32 %v348, 5
        %v350 = vand.u32 %v348, 31
        %v351 = vsub.s32 32, %v350
        %v352 = vshrl.u32 683565275, %v351
        %v353 = vshll.u32 683565275, %v350
        %v354 = vshrl.u32 2475754826, %v351
        %v355 = vor.u32 %v353, %v354
        %v356 = vshll.u32 2475754826, %v350
        %v357 = vshrl.u32 2131351028, %v351
        %v358 = vor.u32 %v356, %v357
        %v359 = vshll.u32 2131351028, %v350
        %v360 = vshrl.u32 2102212464, %v351
        %v361 = vor.u32 %v359, %v360
        %v362 = vshll.u32 2102212464, %v350
        %v363 = vshrl.u32 920167782, %v351
        %v364 = vor.u32 %v362, %v363
        %v365 = vshll.u32 920167782, %v350
        %v366 = vshrl.u32 1326507024, %v351
        %v367 = vor.u32 %v365, %v366
        %vm368 = vcmp.lt.s32.totalorder %v349, 1
        %vm369 = vcmp.lt.s32.totalorder %v349, 2
        %vm370 = vcmp.lt.s32.totalorder %v349, 3
        %vm371 = vcmp.lt.s32.totalorder %v349, 4
        %v372 = vsel %vm368, %v352, %v355
        %v373 = vsel %vm371, %v361, 2102212464
        %v374 = vsel %vm370, %v358, %v373
        %v375 = vsel %vm369, %v372, %v374
        %v376 = vsel %vm368, %v355, %v358
        %v377 = vsel %vm371, %v364, 920167782
        %v378 = vsel %vm370, %v361, %v377
        %v379 = vsel %vm369, %v376, %v378
        %v380 = vsel %vm368, %v358, %v361
        %v381 = vsel %vm371, %v367, 1326507024
        %v382 = vsel %vm370, %v364, %v381
        %v383 = vsel %vm369, %v380, %v382
        %v384 = vshll.u32 %v344, 8
        %v385 = vmul.u32.u64.compose %v384, %v383
        %v386 = vextract.low.u32 %v385
        %v387 = vextract.high.u32 %v385
        %v388 = vmul.u32.u64.compose %v384, %v379
        %v389 = vextract.low.u32 %v388
        %v390 = vextract.high.u32 %v388
        %v391 = vmul.u32 %v384, %v375
        %v392 = vadd.s32 %v387, %v389
        %vm393 = vc.u32 %v387, %v389
        %v394 = vadd.s32 %v390, 1
        %v395 = vsel %vm393, %v394, %v390
        %v396 = vadd.s32 %v391, %v395
        %v397 = vadd.s32 %v396, 536870912
        %v398 = vshrl.u32 %v397, 30
        %v399 = vshll.u32 %v398, 30
        %v400 = vsub.s32 %v396, %v399
        %vm401 = vcmp.lt.s32.totalorder %v400, 0
        %v402 = vsub.s32 0, %v400
        %v403 = vsel %vm401, %v402, %v400
        %v404 = vclz %v403
        %v405 = vsub.s32 %v404, 2
        %vm406 = vcmp.gt.s32.totalorder 0, %v405
        %v407 = vsel %vm406, 0, %v405
        %v408 = vsub.s32 32, %v407
        %v409 = vshll.u32 %v400, %v407
        %v410 = vshrl.u32 %v392, %v408
        %v411 = vor.u32 %v409, %v410
        %v412 = vsub.s32 4294967266, %v407
        %v413 = vadd.s32 %v412, 127
        %v414 = vshll.u32 %v413, 23
        %v415 = vor.u32 4788187, %v414
        %v416 = vand.u32 2147483647, %v415
        %v418 = vcvt.s32.f32 %v411
        %v419 = vmul.f32 %v418, %v416
        %v420 = vxor.u32 %v419, 2147483648
        %v421 = vsel %vm338, %v420, %v419
        %v422 = vsub.s32 4, %v398
        %v423 = vsel %vm338, %v422, %v398
        %v424 = vsel %vm337, %v335, %v421
        %v425 = vsel %vm337, 0, %v423
        %v426 = vcosq.f32.pop %v424
        %v427 = vsinq.f32.pop %v424
        %vm428 = vweird.f32 %v335
        %v429 = vadd.s32 %v425, 3
        %v430 = vand.u32 %v429, 3
        %vm431 = vcmp.lt.s32.totalorder %v430, 2
        %vm432 = vcmp.eq.s32.totalorder %v430, 0
        %v433 = vxor.u32 %v427, 2147483648
        %v434 = vsel %vm432, %v426, %v433
        %vm435 = vcmp.eq.s32.totalorder %v430, 2
        %v436 = vxor.u32 %v426, 2147483648
        %v437 = vsel %vm435, %v436, %v427
        %v438 = vsel %vm431, %v434, %v437
        %v439 = vsel %vm428, nan, %v438
        %v441 = vcombine.high %v439, %v439
        %v443 = vunpack.c.l.s4 1983009808
        %v444 = vunpack.c.0.s8 %v443
        %v445 = vlaneseq
        %v446 = vshrl.u32 %v445, 7
        %v447 = vsub.s32 %v444, %v446
        %v448 = vrot.slane %v439, %v447
        %v450 = vunpack.c.l.s4 1983009808
        %v451 = vunpack.c.0.s8 %v450
        %v452 = vlaneseq
        %v453 = vshrl.u32 %v452, 7
        %v454 = vsub.s32 %v451, %v453
        %v455 = vrot.slane %v441, %v454
        %v456 = vcombine.high %v448, %v448
        %v457 = vcombine.high %v455, %v455
        %vm462 = vcmask 1041408
        %v463 = vsel %vm462, %v448, 0.0
        %v464 = vsel %vm462, %v456, 0.0
        %v465 = vadd.f32 %v463, %v464
        %v466 = vsel %vm462, %v455, 0.0
        %v467 = vadd.f32 %v465, %v466
        %vm468 = vcmask 123904
        %v469 = vsel %vm468, %v457, 0.0
        %v470 = vadd.f32 %v467, %v469
        %471 = vadd.xlane.f32.xlu0 %v470
        %v472 = vpop.xlane.xlu0 %471
        %s473 = sld [smem:[#allocation7 + $0x80]]
        %v474 = vstv %s473
        %v475 = vmul.f32 %v474, %v311
        %s476 = sld [smem:[#allocation7 + $0x81]]
        %v477 = vstv %s476
        %v478 = vmul.f32 %v477, %v316
        %v479 = vadd.f32 %v475, %v478
        %s480 = sld [smem:[#allocation7 + $0x82]]
        %v481 = vstv %s480
        %v482 = vmul.f32 %v481, %v322
        %v483 = vadd.f32 %v479, %v482
        %s484 = sld [smem:[#allocation7 + $0x83]]
        %v485 = vstv %s484
        %v486 = vmul.f32 %v485, %v328
        %v487 = vadd.f32 %v483, %v486
        %s488 = sld [smem:[#allocation8 + $0x1]]
        %v489 = vstv %s488
        %v490 = vadd.f32 %v487, %v489
        %v491 = vand.u32 2147483647, %v490
        %vm492 = vcmp.le.f32.partialorder %v491, 0.7853982
        %vm493 = vcmp.lt.s32.totalorder %v490, 0
        %v494 = vand.u32 %v490, 2139095040
        %v495 = vshrl.u32 %v494, 23
        %v496 = vsub.s32 %v495, 127
        %v497 = vand.u32 2147483647, %v490
        %v498 = vand.u32 %v497, 8388607
        %v499 = vor.u32 %v498, 8388608
        %v500 = vsub.s32 0, %v499
        %v501 = vadd.s32 %v496, 1
        %vm502 = vcmp.gt.s32.totalorder %v501, 0
        %v503 = vsel %vm502, %v501, 0
        %v504 = vshrl.u32 %v503, 5
        %v505 = vand.u32 %v503, 31
        %v506 = vsub.s32 32, %v505
        %v507 = vshrl.u32 683565275, %v506
        %v508 = vshll.u32 683565275, %v505
        %v509 = vshrl.u32 2475754826, %v506
        %v510 = vor.u32 %v508, %v509
        %v511 = vshll.u32 2475754826, %v505
        %v512 = vshrl.u32 2131351028, %v506
        %v513 = vor.u32 %v511, %v512
        %v514 = vshll.u32 2131351028, %v505
        %v515 = vshrl.u32 2102212464, %v506
        %v516 = vor.u32 %v514, %v515
        %v517 = vshll.u32 2102212464, %v505
        %v518 = vshrl.u32 920167782, %v506
        %v519 = vor.u32 %v517, %v518
        %v520 = vshll.u32 920167782, %v505
        %v521 = vshrl.u32 1326507024, %v506
        %v522 = vor.u32 %v520, %v521
        %vm523 = vcmp.lt.s32.totalorder %v504, 1
        %vm524 = vcmp.lt.s32.totalorder %v504, 2
        %vm525 = vcmp.lt.s32.totalorder %v504, 3
        %vm526 = vcmp.lt.s32.totalorder %v504, 4
        %v527 = vsel %vm523, %v507, %v510
        %v528 = vsel %vm526, %v516, 2102212464
        %v529 = vsel %vm525, %v513, %v528
        %v530 = vsel %vm524, %v527, %v529
        %v531 = vsel %vm523, %v510, %v513
        %v532 = vsel %vm526, %v519, 920167782
        %v533 = vsel %vm525, %v516, %v532
        %v534 = vsel %vm524, %v531, %v533
        %v535 = vsel %vm523, %v513, %v516
        %v536 = vsel %vm526, %v522, 1326507024
        %v537 = vsel %vm525, %v519, %v536
        %v538 = vsel %vm524, %v535, %v537
        %v539 = vshll.u32 %v499, 8
        %v540 = vmul.u32.u64.compose %v539, %v538
        %v541 = vextract.low.u32 %v540
        %v542 = vextract.high.u32 %v540
        %v543 = vmul.u32.u64.compose %v539, %v534
        %v544 = vextract.low.u32 %v543
        %v545 = vextract.high.u32 %v543
        %v546 = vmul.u32 %v539, %v530
        %v547 = vadd.s32 %v542, %v544
        %vm548 = vc.u32 %v542, %v544
        %v549 = vadd.s32 %v545, 1
        %v550 = vsel %vm548, %v549, %v545
        %v551 = vadd.s32 %v546, %v550
        %v552 = vadd.s32 %v551, 536870912
        %v553 = vshrl.u32 %v552, 30
        %v554 = vshll.u32 %v553, 30
        %v555 = vsub.s32 %v551, %v554
        %vm556 = vcmp.lt.s32.totalorder %v555, 0
        %v557 = vsub.s32 0, %v555
        %v558 = vsel %vm556, %v557, %v555
        %v559 = vclz %v558
        %v560 = vsub.s32 %v559, 2
        %vm561 = vcmp.gt.s32.totalorder 0, %v560
        %v562 = vsel %vm561, 0, %v560
        %v563 = vsub.s32 32, %v562
        %v564 = vshll.u32 %v555, %v562
        %v565 = vshrl.u32 %v547, %v563
        %v566 = vor.u32 %v564, %v565
        %v567 = vsub.s32 4294967266, %v562
        %v568 = vadd.s32 %v567, 127
        %v569 = vshll.u32 %v568, 23
        %v570 = vor.u32 4788187, %v569
        %v571 = vand.u32 2147483647, %v570
        %v573 = vcvt.s32.f32 %v566
        %v574 = vmul.f32 %v573, %v571
        %v575 = vxor.u32 %v574, 2147483648
        %v576 = vsel %vm493, %v575, %v574
        %v577 = vsub.s32 4, %v553
        %v578 = vsel %vm493, %v577, %v553
        %v579 = vsel %vm492, %v490, %v576
        %v580 = vsel %vm492, 0, %v578
        %v581 = vcosq.f32.pop %v579
        %v582 = vsinq.f32.pop %v579
        %vm583 = vweird.f32 %v490
        %v584 = vadd.s32 %v580, 3
        %v585 = vand.u32 %v584, 3
        %vm586 = vcmp.lt.s32.totalorder %v585, 2
        %vm587 = vcmp.eq.s32.totalorder %v585, 0
        %v588 = vxor.u32 %v582, 2147483648
        %v589 = vsel %vm587, %v581, %v588
        %vm590 = vcmp.eq.s32.totalorder %v585, 2
        %v591 = vxor.u32 %v581, 2147483648
        %v592 = vsel %vm590, %v591, %v582
        %v593 = vsel %vm586, %v589, %v592
        %v594 = vsel %vm583, nan, %v593
        %v596 = vcombine.high %v594, %v594
        %v598 = vunpack.c.l.s4 1983009808
        %v599 = vunpack.c.0.s8 %v598
        %v600 = vlaneseq
        %v601 = vshrl.u32 %v600, 7
        %v602 = vsub.s32 %v599, %v601
        %v603 = vrot.slane %v594, %v602
        %v605 = vunpack.c.l.s4 1983009808
        %v606 = vunpack.c.0.s8 %v605
        %v607 = vlaneseq
        %v608 = vshrl.u32 %v607, 7
        %v609 = vsub.s32 %v606, %v608
        %v610 = vrot.slane %v596, %v609
        %v611 = vcombine.high %v603, %v603
        %v612 = vcombine.high %v610, %v610
        %v617 = vsel %vm462, %v603, 0.0
        %v618 = vsel %vm462, %v611, 0.0
        %v619 = vadd.f32 %v617, %v618
        %v620 = vsel %vm462, %v610, 0.0
        %v621 = vadd.f32 %v619, %v620
        %v622 = vsel %vm468, %v612, 0.0
        %v623 = vadd.f32 %v621, %v622
        %624 = vadd.xlane.f32.xlu0 %v623
        %v625 = vpop.xlane.xlu0 %624
        %s626 = sld [smem:[#allocation7 + $0x100]]
        %v627 = vstv %s626
        %v628 = vmul.f32 %v627, %v311
        %s629 = sld [smem:[#allocation7 + $0x101]]
        %v630 = vstv %s629
        %v631 = vmul.f32 %v630, %v316
        %v632 = vadd.f32 %v628, %v631
        %s633 = sld [smem:[#allocation7 + $0x102]]
        %v634 = vstv %s633
        %v635 = vmul.f32 %v634, %v322
        %v636 = vadd.f32 %v632, %v635
        %s637 = sld [smem:[#allocation7 + $0x103]]
        %v638 = vstv %s637
        %v639 = vmul.f32 %v638, %v328
        %v640 = vadd.f32 %v636, %v639
        %s641 = sld [smem:[#allocation8 + $0x2]]
        %v642 = vstv %s641
        %v643 = vadd.f32 %v640, %v642
        %v644 = vand.u32 2147483647, %v643
        %vm645 = vcmp.le.f32.partialorder %v644, 0.7853982
        %vm646 = vcmp.lt.s32.totalorder %v643, 0
        %v647 = vand.u32 %v643, 2139095040
        %v648 = vshrl.u32 %v647, 23
        %v649 = vsub.s32 %v648, 127
        %v650 = vand.u32 2147483647, %v643
        %v651 = vand.u32 %v650, 8388607
        %v652 = vor.u32 %v651, 8388608
        %v653 = vsub.s32 0, %v652
        %v654 = vadd.s32 %v649, 1
        %vm655 = vcmp.gt.s32.totalorder %v654, 0
        %v656 = vsel %vm655, %v654, 0
        %v657 = vshrl.u32 %v656, 5
        %v658 = vand.u32 %v656, 31
        %v659 = vsub.s32 32, %v658
        %v660 = vshrl.u32 683565275, %v659
        %v661 = vshll.u32 683565275, %v658
        %v662 = vshrl.u32 2475754826, %v659
        %v663 = vor.u32 %v661, %v662
        %v664 = vshll.u32 2475754826, %v658
        %v665 = vshrl.u32 2131351028, %v659
        %v666 = vor.u32 %v664, %v665
        %v667 = vshll.u32 2131351028, %v658
        %v668 = vshrl.u32 2102212464, %v659
        %v669 = vor.u32 %v667, %v668
        %v670 = vshll.u32 2102212464, %v658
        %v671 = vshrl.u32 920167782, %v659
        %v672 = vor.u32 %v670, %v671
        %v673 = vshll.u32 920167782, %v658
        %v674 = vshrl.u32 1326507024, %v659
        %v675 = vor.u32 %v673, %v674
        %vm676 = vcmp.lt.s32.totalorder %v657, 1
        %vm677 = vcmp.lt.s32.totalorder %v657, 2
        %vm678 = vcmp.lt.s32.totalorder %v657, 3
        %vm679 = vcmp.lt.s32.totalorder %v657, 4
        %v680 = vsel %vm676, %v660, %v663
        %v681 = vsel %vm679, %v669, 2102212464
        %v682 = vsel %vm678, %v666, %v681
        %v683 = vsel %vm677, %v680, %v682
        %v684 = vsel %vm676, %v663, %v666
        %v685 = vsel %vm679, %v672, 920167782
        %v686 = vsel %vm678, %v669, %v685
        %v687 = vsel %vm677, %v684, %v686
        %v688 = vsel %vm676, %v666, %v669
        %v689 = vsel %vm679, %v675, 1326507024
        %v690 = vsel %vm678, %v672, %v689
        %v691 = vsel %vm677, %v688, %v690
        %v692 = vshll.u32 %v652, 8
        %v693 = vmul.u32.u64.compose %v692, %v691
        %v694 = vextract.low.u32 %v693
        %v695 = vextract.high.u32 %v693
        %v696 = vmul.u32.u64.compose %v692, %v687
        %v697 = vextract.low.u32 %v696
        %v698 = vextract.high.u32 %v696
        %v699 = vmul.u32 %v692, %v683
        %v700 = vadd.s32 %v695, %v697
        %vm701 = vc.u32 %v695, %v697
        %v702 = vadd.s32 %v698, 1
        %v703 = vsel %vm701, %v702, %v698
        %v704 = vadd.s32 %v699, %v703
        %v705 = vadd.s32 %v704, 536870912
        %v706 = vshrl.u32 %v705, 30
        %v707 = vshll.u32 %v706, 30
        %v708 = vsub.s32 %v704, %v707
        %vm709 = vcmp.lt.s32.totalorder %v708, 0
        %v710 = vsub.s32 0, %v708
        %v711 = vsel %vm709, %v710, %v708
        %v712 = vclz %v711
        %v713 = vsub.s32 %v712, 2
        %vm714 = vcmp.gt.s32.totalorder 0, %v713
        %v715 = vsel %vm714, 0, %v713
        %v716 = vsub.s32 32, %v715
        %v717 = vshll.u32 %v708, %v715
        %v718 = vshrl.u32 %v700, %v716
        %v719 = vor.u32 %v717, %v718
        %v720 = vsub.s32 4294967266, %v715
        %v721 = vadd.s32 %v720, 127
        %v722 = vshll.u32 %v721, 23
        %v723 = vor.u32 4788187, %v722
        %v724 = vand.u32 2147483647, %v723
        %v726 = vcvt.s32.f32 %v719
        %v727 = vmul.f32 %v726, %v724
        %v728 = vxor.u32 %v727, 2147483648
        %v729 = vsel %vm646, %v728, %v727
        %v730 = vsub.s32 4, %v706
        %v731 = vsel %vm646, %v730, %v706
        %v732 = vsel %vm645, %v643, %v729
        %v733 = vsel %vm645, 0, %v731
        %v734 = vcosq.f32.pop %v732
        %v735 = vsinq.f32.pop %v732
        %vm736 = vweird.f32 %v643
        %v737 = vadd.s32 %v733, 3
        %v738 = vand.u32 %v737, 3
        %vm739 = vcmp.lt.s32.totalorder %v738, 2
        %vm740 = vcmp.eq.s32.totalorder %v738, 0
        %v741 = vxor.u32 %v735, 2147483648
        %v742 = vsel %vm740, %v734, %v741
        %vm743 = vcmp.eq.s32.totalorder %v738, 2
        %v744 = vxor.u32 %v734, 2147483648
        %v745 = vsel %vm743, %v744, %v735
        %v746 = vsel %vm739, %v742, %v745
        %v747 = vsel %vm736, nan, %v746
        %v749 = vcombine.high %v747, %v747
        %v751 = vunpack.c.l.s4 1983009808
        %v752 = vunpack.c.0.s8 %v751
        %v753 = vlaneseq
        %v754 = vshrl.u32 %v753, 7
        %v755 = vsub.s32 %v752, %v754
        %v756 = vrot.slane %v747, %v755
        %v758 = vunpack.c.l.s4 1983009808
        %v759 = vunpack.c.0.s8 %v758
        %v760 = vlaneseq
        %v761 = vshrl.u32 %v760, 7
        %v762 = vsub.s32 %v759, %v761
        %v763 = vrot.slane %v749, %v762
        %v764 = vcombine.high %v756, %v756
        %v765 = vcombine.high %v763, %v763
        %v770 = vsel %vm462, %v756, 0.0
        %v771 = vsel %vm462, %v764, 0.0
        %v772 = vadd.f32 %v770, %v771
        %v773 = vsel %vm462, %v763, 0.0
        %v774 = vadd.f32 %v772, %v773
        %v775 = vsel %vm468, %v765, 0.0
        %v776 = vadd.f32 %v774, %v775
        %777 = vadd.xlane.f32.xlu0 %v776
        %v778 = vpop.xlane.xlu0 %777
        %s779 = sld [smem:[#allocation7 + $0x180]]
        %v780 = vstv %s779
        %v781 = vmul.f32 %v780, %v311
        %s782 = sld [smem:[#allocation7 + $0x181]]
        %v783 = vstv %s782
        %v784 = vmul.f32 %v783, %v316
        %v785 = vadd.f32 %v781, %v784
        %s786 = sld [smem:[#allocation7 + $0x182]]
        %v787 = vstv %s786
        %v788 = vmul.f32 %v787, %v322
        %v789 = vadd.f32 %v785, %v788
        %s790 = sld [smem:[#allocation7 + $0x183]]
        %v791 = vstv %s790
        %v792 = vmul.f32 %v791, %v328
        %v793 = vadd.f32 %v789, %v792
        %s794 = sld [smem:[#allocation8 + $0x3]]
        %v795 = vstv %s794
        %v796 = vadd.f32 %v793, %v795
        %v797 = vand.u32 2147483647, %v796
        %vm798 = vcmp.le.f32.partialorder %v797, 0.7853982
        %vm799 = vcmp.lt.s32.totalorder %v796, 0
        %v800 = vand.u32 %v796, 2139095040
        %v801 = vshrl.u32 %v800, 23
        %v802 = vsub.s32 %v801, 127
        %v803 = vand.u32 2147483647, %v796
        %v804 = vand.u32 %v803, 8388607
        %v805 = vor.u32 %v804, 8388608
        %v806 = vsub.s32 0, %v805
        %v807 = vadd.s32 %v802, 1
        %vm808 = vcmp.gt.s32.totalorder %v807, 0
        %v809 = vsel %vm808, %v807, 0
        %v810 = vshrl.u32 %v809, 5
        %v811 = vand.u32 %v809, 31
        %v812 = vsub.s32 32, %v811
        %v813 = vshrl.u32 683565275, %v812
        %v814 = vshll.u32 683565275, %v811
        %v815 = vshrl.u32 2475754826, %v812
        %v816 = vor.u32 %v814, %v815
        %v817 = vshll.u32 2475754826, %v811
        %v818 = vshrl.u32 2131351028, %v812
        %v819 = vor.u32 %v817, %v818
        %v820 = vshll.u32 2131351028, %v811
        %v821 = vshrl.u32 2102212464, %v812
        %v822 = vor.u32 %v820, %v821
        %v823 = vshll.u32 2102212464, %v811
        %v824 = vshrl.u32 920167782, %v812
        %v825 = vor.u32 %v823, %v824
        %v826 = vshll.u32 920167782, %v811
        %v827 = vshrl.u32 1326507024, %v812
        %v828 = vor.u32 %v826, %v827
        %vm829 = vcmp.lt.s32.totalorder %v810, 1
        %vm830 = vcmp.lt.s32.totalorder %v810, 2
        %vm831 = vcmp.lt.s32.totalorder %v810, 3
        %vm832 = vcmp.lt.s32.totalorder %v810, 4
        %v833 = vsel %vm829, %v813, %v816
        %v834 = vsel %vm832, %v822, 2102212464
        %v835 = vsel %vm831, %v819, %v834
        %v836 = vsel %vm830, %v833, %v835
        %v837 = vsel %vm829, %v816, %v819
        %v838 = vsel %vm832, %v825, 920167782
        %v839 = vsel %vm831, %v822, %v838
        %v840 = vsel %vm830, %v837, %v839
        %v841 = vsel %vm829, %v819, %v822
        %v842 = vsel %vm832, %v828, 1326507024
        %v843 = vsel %vm831, %v825, %v842
        %v844 = vsel %vm830, %v841, %v843
        %v845 = vshll.u32 %v805, 8
        %v846 = vmul.u32.u64.compose %v845, %v844
        %v847 = vextract.low.u32 %v846
        %v848 = vextract.high.u32 %v846
        %v849 = vmul.u32.u64.compose %v845, %v840
        %v850 = vextract.low.u32 %v849
        %v851 = vextract.high.u32 %v849
        %v852 = vmul.u32 %v845, %v836
        %v853 = vadd.s32 %v848, %v850
        %vm854 = vc.u32 %v848, %v850
        %v855 = vadd.s32 %v851, 1
        %v856 = vsel %vm854, %v855, %v851
        %v857 = vadd.s32 %v852, %v856
        %v858 = vadd.s32 %v857, 536870912
        %v859 = vshrl.u32 %v858, 30
        %v860 = vshll.u32 %v859, 30
        %v861 = vsub.s32 %v857, %v860
        %vm862 = vcmp.lt.s32.totalorder %v861, 0
        %v863 = vsub.s32 0, %v861
        %v864 = vsel %vm862, %v863, %v861
        %v865 = vclz %v864
        %v866 = vsub.s32 %v865, 2
        %vm867 = vcmp.gt.s32.totalorder 0, %v866
        %v868 = vsel %vm867, 0, %v866
        %v869 = vsub.s32 32, %v868
        %v870 = vshll.u32 %v861, %v868
        %v871 = vshrl.u32 %v853, %v869
        %v872 = vor.u32 %v870, %v871
        %v873 = vsub.s32 4294967266, %v868
        %v874 = vadd.s32 %v873, 127
        %v875 = vshll.u32 %v874, 23
        %v876 = vor.u32 4788187, %v875
        %v877 = vand.u32 2147483647, %v876
        %v879 = vcvt.s32.f32 %v872
        %v880 = vmul.f32 %v879, %v877
        %v881 = vxor.u32 %v880, 2147483648
        %v882 = vsel %vm799, %v881, %v880
        %v883 = vsub.s32 4, %v859
        %v884 = vsel %vm799, %v883, %v859
        %v885 = vsel %vm798, %v796, %v882
        %v886 = vsel %vm798, 0, %v884
        %v887 = vcosq.f32.pop %v885
        %v888 = vsinq.f32.pop %v885
        %vm889 = vweird.f32 %v796
        %v890 = vadd.s32 %v886, 3
        %v891 = vand.u32 %v890, 3
        %vm892 = vcmp.lt.s32.totalorder %v891, 2
        %vm893 = vcmp.eq.s32.totalorder %v891, 0
        %v894 = vxor.u32 %v888, 2147483648
        %v895 = vsel %vm893, %v887, %v894
        %vm896 = vcmp.eq.s32.totalorder %v891, 2
        %v897 = vxor.u32 %v887, 2147483648
        %v898 = vsel %vm896, %v897, %v888
        %v899 = vsel %vm892, %v895, %v898
        %v900 = vsel %vm889, nan, %v899
        %v902 = vcombine.high %v900, %v900
        %v904 = vunpack.c.l.s4 1983009808
        %v905 = vunpack.c.0.s8 %v904
        %v906 = vlaneseq
        %v907 = vshrl.u32 %v906, 7
        %v908 = vsub.s32 %v905, %v907
        %v909 = vrot.slane %v900, %v908
        %v911 = vunpack.c.l.s4 1983009808
        %v912 = vunpack.c.0.s8 %v911
        %v913 = vlaneseq
        %v914 = vshrl.u32 %v913, 7
        %v915 = vsub.s32 %v912, %v914
        %v916 = vrot.slane %v902, %v915
        %v917 = vcombine.high %v909, %v909
        %v918 = vcombine.high %v916, %v916
        %v923 = vsel %vm462, %v909, 0.0
        %v924 = vsel %vm462, %v917, 0.0
        %v925 = vadd.f32 %v923, %v924
        %v926 = vsel %vm462, %v916, 0.0
        %v927 = vadd.f32 %v925, %v926
        %v928 = vsel %vm468, %v918, 0.0
        %v929 = vadd.f32 %v927, %v928
        %930 = vadd.xlane.f32.xlu0 %v929
        %v931 = vpop.xlane.xlu0 %930
        %s932 = sld [smem:[#allocation9]]
        %v933 = vstv %s932
        %v934 = vmul.f32 %v933, %v472
        %s935 = sld [smem:[#allocation9 + $0x1]]
        %v936 = vstv %s935
        %v937 = vmul.f32 %v936, %v625
        %v938 = vadd.f32 %v934, %v937
        %s939 = sld [smem:[#allocation9 + $0x2]]
        %v940 = vstv %s939
        %v941 = vmul.f32 %v940, %v778
        %v942 = vadd.f32 %v938, %v941
        %s943 = sld [smem:[#allocation9 + $0x3]]
        %v944 = vstv %s943
        %v945 = vmul.f32 %v944, %v931
        %v946 = vadd.f32 %v942, %v945
        %s947 = sld [smem:[#allocation11]]
        %v948 = vstv %s947
        %v949 = vadd.f32 %v946, %v948
        %s950 = sld [smem:[#allocation9 + $0x80]]
        %v951 = vstv %s950
        %v952 = vmul.f32 %v951, %v472
        %s953 = sld [smem:[#allocation9 + $0x81]]
        %v954 = vstv %s953
        %v955 = vmul.f32 %v954, %v625
        %v956 = vadd.f32 %v952, %v955
        %s957 = sld [smem:[#allocation9 + $0x82]]
        %v958 = vstv %s957
        %v959 = vmul.f32 %v958, %v778
        %v960 = vadd.f32 %v956, %v959
        %s961 = sld [smem:[#allocation9 + $0x83]]
        %v962 = vstv %s961
        %v963 = vmul.f32 %v962, %v931
        %v964 = vadd.f32 %v960, %v963
        %s965 = sld [smem:[#allocation11 + $0x1]]
        %v966 = vstv %s965
        %v967 = vadd.f32 %v964, %v966
        %v969 = vlaneseq
        %v970 = vand.u32 %v969, 127
        %v971 = vlaneseq
        %v972 = vshrl.u32 %v971, 7
        %v973 = vsub.s32 %v970, %v972
        %v974 = vrot.slane %v949, %v973
        %v977 = vlaneseq
        %v978 = vshrl.u32 %v977, 7
        %v979 = vsub.s32 %v970, %v978
        %v980 = vrot.slane %v967, %v979
        %vm982 = vcmask 1040384
        %v983 = vsel %vm982, %v974, %v980
        %vm984 = vcmask 9216
        %985 = vst.msk [vmem:[%s310] sm:$0x3] %vm984, %v983
        %s986 = sand.u32 %s159, 1
        %s987 = scalar_lea.sflag [#allocation4], %s986
        %s988 = sand.u32 %s159, 1
        %s989 = smul.addr %s988, 2
        %s990 = scalar_lea.vmem [#allocation12], %s989
        // Predicated region
        $region61: #{tpu_custom_call.1} parent=39 // pred_check
          %p991 = pneg %p169
        $region62: #{tpu_custom_call.1} parent=39 // pred_check_branch
          %993 = sbr.rel (%p991) target = $region64
        $region63: #{tpu_custom_call.1} parent=39 // pred_region
          %s995 = ssub.s32 32, 32
          %996 = vsyncadd %s987, %s995
          %s997 = sadd.s32 %s30, %s29
          %s998 = smul.addr %s997, 32
          %s999 = scalar_lea.hbm %s5, %s998
          %s1001 = sshll.u32 %s990, 4
          %s1002 = int_to_ptr.vmem [resolvable:$true] %s1001
          %1004 = dma.vmem_to_hbm [thread:$0]  %s1002, 32, %s999, %s987
        $region64: #{tpu_custom_call.1} parent=39 // pred_fallthru
          _
      $region40: #{tpu_custom_call.1} parent=5 // pred_fallthru
        _
      %p1005 = scmp.le.s32.totalorder 2, %s20
      // Predicated region
      $region65: #{tpu_custom_call.1} parent=5 // pred_check
        %p1006 = pneg %p1005
      $region66: #{tpu_custom_call.1} parent=5 // pred_check_branch
        %1008 = sbr.rel (%p1006) target = $region68
      $region67: #{tpu_custom_call.1} parent=5 // pred_region
        %s1009 = ssub.s32 %s20, 2
        // Predicated region
        $region69: #{tpu_custom_call.1} parent=67 // pred_check
          %p1010 = pneg %p175
        $region70: #{tpu_custom_call.1} parent=67 // pred_check_branch
          %1012 = sbr.rel (%p1010) target = $region72
        $region71: #{tpu_custom_call.1} parent=67 // pred_region
          %s1013 = sand.u32 %s160, 1
          %s1014 = scalar_lea.sflag [#allocation4], %s1013
          %s1015 = sand.u32 %s160, 1
          %s1016 = smul.addr %s1015, 2
          %s1017 = scalar_lea.vmem [#allocation12], %s1016
          %1018 = dma.done %s1014, 32
        $region72: #{tpu_custom_call.1} parent=67 // pred_fallthru
          _
      $region68: #{tpu_custom_call.1} parent=5 // pred_fallthru
        _
    $region6: #{tpu_custom_call.1} parent=1 // loop_footer
      %s24 = sadd.s32 1, %s20
    $region7: #{tpu_custom_call.1} parent=1 // loop_footer_branch
      %19 = sbr.rel target = $region3
    $region8: #{tpu_custom_call.1} parent=1 // loop_exit
      _
    %1019 = vsyncpa [#allocation3], 1
    %s1020 = scalar_lea.sflag [#allocation3], 1
    %1021 = vsyncpa %s1020, 1
    %1022 = vsyncpa [#allocation4], 1
    %s1023 = scalar_lea.sflag [#allocation4], 1
    %1024 = vsyncpa %s1023, 1
    %1025 = vsyncpa [#allocation5], 1
    %s1026 = scalar_lea.sflag [#allocation5], 1
    %1027 = vsyncpa %s1026, 1
    %1028 = vsyncpa [#allocation6], 1
    %s1029 = scalar_lea.sflag [#allocation6], 1
    %1030 = vsyncpa %s1029, 1
    %1031 = vsyncpa [#allocation10], 1

</llo_original>
